<compile_context>
chip_gen: v5e
topology: v5e:2x2
jax: 0.10.0
libtpu: 0.0.40
codegen_flags: <defaults>
</compile_context>

<pallas_src>
import functools
from typing import NamedTuple

import jax
import jax.numpy as jnp
from jax.experimental import pallas as pl
from jax.experimental.pallas import tpu as pltpu


class AvatarModel(NamedTuple):
    vert_pos: jax.Array   # (B, V, 3)
    vert_nor: jax.Array   # (B, V, 3)
    joint_T: jax.Array    # (B, J, 4, 4)


def _round_up(x: int, m: int) -> int:
    return (x + m - 1) // m * m


def _blend_kernel(p_ref, s_ref, base_pos_ref, base_nor_ref,
                  pos_out_ref, nor_out_ref):
    """Fused blend-shape + LBS for one (vertex-tile, batch) grid step.

    p_ref        : (1, 15, Rc) f32  per-batch packed params:
                     rows 0..11  = top 3 rows of each 4x4 joint transform,
                                   transposed so P @ S yields the blended affine
                     rows 12..14 = betas, block-diagonal over x/y/z so the same
                                   matmul also yields the blend-shape offsets
    s_ref        : (Rc, Vt)         static per-vertex matrix:
                     rows 0..J-1    = LBS weights (transposed)
                     rows J..J+3K-1 = blend-shape directions
    base_pos_ref : (3, Vt) f32      rest-pose positions (feature-major)
    base_nor_ref : (3, Vt) f32      rest-pose normals   (feature-major)
    outputs      : (1, 3, Vt)       lane-dense posed positions / normals
    """
    P = p_ref[0]                                      # (15, Rc) f32
    S = s_ref[...].astype(jnp.float32)                # (Rc, Vt) upcast in-kernel

    # Single MXU matmul: blended affine rows + blend-shape deltas, Vt in lanes.
    MD = jnp.dot(P, S, preferred_element_type=jnp.float32)   # (15, Vt)

    shaped = base_pos_ref[...] + MD[12:15, :]         # (3, Vt)
    px, py, pz = shaped[0:1, :], shaped[1:2, :], shaped[2:3, :]

    def rotate(x, y, z):
        ox = MD[0:1, :] * x + MD[1:2, :] * y + MD[2:3, :] * z
        oy = MD[4:5, :] * x + MD[5:6, :] * y + MD[6:7, :] * z
        oz = MD[8:9, :] * x + MD[9:10, :] * y + MD[10:11, :] * z
        return ox, oy, oz

    ox, oy, oz = rotate(px, py, pz)
    pos = jnp.concatenate(
        [ox + MD[3:4, :], oy + MD[7:8, :], oz + MD[11:12, :]], axis=0)  # (3, Vt)

    bn = base_nor_ref[...]
    nx, ny, nz = rotate(bn[0:1, :], bn[1:2, :], bn[2:3, :])
    inv = jax.lax.rsqrt(nx * nx + ny * ny + nz * nz + 1e-12)
    nor = jnp.concatenate([nx * inv, ny * inv, nz * inv], axis=0)       # (3, Vt)

    pos_out_ref[...] = pos[None, :, :].astype(pos_out_ref.dtype)
    nor_out_ref[...] = nor[None, :, :].astype(nor_out_ref.dtype)


@functools.partial(jax.jit, static_argnames=("vt", "mesh_dtype"))
def avatar_blend(betas, joint_T, base_pos, base_nor, shape_dirs, lbs_w,
                 *, vt=512, mesh_dtype=jnp.bfloat16):
    """betas: (B, K); joint_T: (B, J, 4, 4); base_pos/base_nor: (V, 3);
    shape_dirs: (V, 3, K); lbs_w: (V, J) -> AvatarModel.

    vt: vertex tile (multiple of 128).  Sweep 512-2048 on v5e/v6e; bias toward
        512-1024 on v7x (64 MiB VMEM).
    mesh_dtype: HBM storage dtype of the big static mesh matrix (bf16 halves
        HBM traffic; f32 accumulation is kept inside the kernel).
    """
    B, K = betas.shape
    J = joint_T.shape[1]
    V = base_pos.shape[0]

    vp = _round_up(V, vt)              # padded vertex count
    rc = _round_up(J + 3 * K, 8)       # padded contraction dim (sublane align)

    # ---- static mesh data, feature-major / lane-dense ----------------------
    # (In a real AvatarBlender module this would be precomputed once at init.)
    dirs_rows = jnp.transpose(shape_dirs, (1, 2, 0)).reshape(3 * K, V)   # (3K, V)
    S = jnp.concatenate([lbs_w.T.astype(jnp.float32),
                         dirs_rows.astype(jnp.float32)], axis=0)         # (J+3K, V)
    S = jnp.pad(S, ((0, rc - (J + 3 * K)), (0, vp - V))).astype(mesh_dtype)

    base_pos_t = jnp.pad(base_pos.T.astype(jnp.float32), ((0, 0), (0, vp - V)))
    base_nor_t = jnp.pad(base_nor.T.astype(jnp.float32), ((0, 0), (0, vp - V)))

    # ---- per-batch packed parameter matrix P (tiny, stays f32) -------------
    jt12 = joint_T[:, :, :3, :].reshape(B, J, 12).astype(jnp.float32)    # (B, J, 12)
    P = jnp.zeros((B, 15, rc), jnp.float32)
    P = P.at[:, 0:12, 0:J].set(jnp.transpose(jt12, (0, 2, 1)))
    for d in range(3):
        P = P.at[:, 12 + d, J + d * K:J + (d + 1) * K].set(
            betas.astype(jnp.float32))

    # batch innermost -> static mesh tiles keep their block index across b and
    # are NOT re-fetched; vertex axis "parallel" for v7x megacore sharding.
    grid = (vp // vt, B)

    pos_l, nor_l = pl.pallas_call(
        _blend_kernel,
        out_shape=(
            jax.ShapeDtypeStruct((B, 3, vp), jnp.float32),
            jax.ShapeDtypeStruct((B, 3, vp), jnp.float32),
        ),
        grid_spec=pltpu.PrefetchScalarGridSpec(
            num_scalar_prefetch=0,
            grid=grid,
            in_specs=[
                pl.BlockSpec((1, 15, rc), lambda v, b: (b, 0, 0)),   # P (per-batch)
                pl.BlockSpec((rc, vt), lambda v, b: (0, v)),          # S (static)
                pl.BlockSpec((3, vt), lambda v, b: (0, v)),           # base_pos
                pl.BlockSpec((3, vt), lambda v, b: (0, v)),           # base_nor
            ],
            out_specs=[
                pl.BlockSpec((1, 3, vt), lambda v, b: (b, 0, v)),
                pl.BlockSpec((1, 3, vt), lambda v, b: (b, 0, v)),
            ],
        ),
        compiler_params=pltpu.CompilerParams(
            dimension_semantics=("parallel", "arbitrary"),
            # Explicit VMEM budget: safe on all generations (above v5e's 16 MiB
            # default, well under v7x's 64 MiB physical).
            vmem_limit_bytes=32 * 1024 * 1024,
        ),
    )(P, S, base_pos_t, base_nor_t)

    # Back to the module's (B, V, 3) interface (wrapper-side layout plumbing).
    pos = jnp.transpose(pos_l[:, :, :V], (0, 2, 1))
    nor = jnp.transpose(nor_l[:, :, :V], (0, 2, 1))
    return AvatarModel(vert_pos=pos, vert_nor=nor, joint_T=joint_T)


def avatar_blend_ref(betas, joint_T, base_pos, base_nor, shape_dirs, lbs_w):
    shaped = base_pos[None] + jnp.einsum("vdk,bk->bvd", shape_dirs, betas)
    M = jnp.einsum("vj,bjmn->bvmn", lbs_w, joint_T)          # (B, V, 4, 4)
    R, t = M[..., :3, :3], M[..., :3, 3]
    pos = jnp.einsum("bvij,bvj->bvi", R, shaped) + t
    # TODO(synk): normals use the blended linear part directly (no
    # inverse-transpose) — matches standard LBS practice / the reference.
    nor = jnp.einsum("bvij,vj->bvi", R, base_nor)
    nor = nor * jax.lax.rsqrt(jnp.sum(nor * nor, -1, keepdims=True) + 1e-12)
    return pos, nor


if __name__ == "__main__":
    # Small shapes: batch=2, verts=640 (exercises padding + multi-tile),
    # joints=8, blend-shape coeffs=8.
    B, V, J, K = 2, 640, 8, 8
    key = jax.random.PRNGKey(0)
    k = jax.random.split(key, 6)

    # Deterministic "module parameters" (rest mesh, blendshape basis, weights).
    base_pos = jax.random.normal(k[0], (V, 3), jnp.float32)
    base_nor = jax.random.normal(k[1], (V, 3), jnp.float32)
    base_nor = base_nor / jnp.linalg.norm(base_nor, axis=-1, keepdims=True)
    shape_dirs = 0.1 * jax.random.normal(k[2], (V, 3, K), jnp.float32)
    lbs_w = jax.nn.softmax(jax.random.normal(k[3], (V, J), jnp.float32), axis=-1)

    # Blending parameters (the `blending_param` forward argument).
    betas = jax.random.normal(k[4], (B, K), jnp.float32)
    A = 0.3 * jax.random.normal(k[5], (B, J, 3, 4), jnp.float32)
    A = A.at[..., :3, :3].add(jnp.eye(3))                     # ~identity rotations
    last_row = jnp.broadcast_to(
        jnp.array([0.0, 0.0, 0.0, 1.0], jnp.float32), (B, J, 1, 4))
    joint_T = jnp.concatenate([A, last_row], axis=-2)         # (B, J, 4, 4)

    ref_pos, ref_nor = avatar_blend_ref(
        betas, joint_T, base_pos, base_nor, shape_dirs, lbs_w)

    # f32 mesh-data path: tight tolerance.
    model = avatar_blend(betas, joint_T, base_pos, base_nor, shape_dirs, lbs_w,
                         vt=256, mesh_dtype=jnp.float32)
    jax.block_until_ready(model.vert_pos)
    jax.block_until_ready(model.vert_nor)
    assert jnp.allclose(model.vert_pos, ref_pos, atol=5e-4, rtol=5e-4)
    assert jnp.allclose(model.vert_nor, ref_nor, atol=5e-4, rtol=5e-4)
    assert model.joint_T.shape == (B, J, 4, 4)

    # bf16 mesh-data path (halved HBM traffic): relaxed tolerance.
    model_bf = avatar_blend(betas, joint_T, base_pos, base_nor, shape_dirs,
                            lbs_w, vt=256, mesh_dtype=jnp.bfloat16)
    jax.block_until_ready(model_bf.vert_pos)
    jax.block_until_ready(model_bf.vert_nor)
    assert jnp.allclose(model_bf.vert_pos, ref_pos, atol=3e-2, rtol=3e-2)
    assert jnp.allclose(model_bf.vert_nor, ref_nor, atol=3e-2, rtol=3e-2)

    print("KERNEL_OK")
</pallas_src>

<mosaic_0001>
module attributes {stable_mosaic.version = 11 : i64} {
  func.func @_blend_kernel(%arg0: i32, %arg1: i32, %arg2: memref<1x15x32xf32, #tpu.memory_space<vmem>>, %arg3: memref<32x256xf32, #tpu.memory_space<vmem>>, %arg4: memref<3x256xf32, #tpu.memory_space<vmem>>, %arg5: memref<3x256xf32, #tpu.memory_space<vmem>>, %arg6: memref<1x3x256xf32, #tpu.memory_space<vmem>>, %arg7: memref<1x3x256xf32, #tpu.memory_space<vmem>>) attributes {dimension_semantics = [#tpu.dimension_semantics<parallel>, #tpu.dimension_semantics<arbitrary>], iteration_bounds = array<i64: 3, 2>, scalar_prefetch = 0 : i64, scratch_operands = 0 : i64, tpu.core_type = #tpu.core_type<tc>, window_params = [{transform_indices = @transform_0, window_bounds = array<i64: 1, 15, 32>}, {transform_indices = @transform_1, window_bounds = array<i64: 32, 256>}, {transform_indices = @transform_2, window_bounds = array<i64: 3, 256>}, {transform_indices = @transform_3, window_bounds = array<i64: 3, 256>}, {transform_indices = @transform_4, window_bounds = array<i64: 1, 3, 256>}, {transform_indices = @transform_5, window_bounds = array<i64: 1, 3, 256>}]} {
    %c0 = arith.constant 0 : index
    %c0_0 = arith.constant 0 : index
    %c0_1 = arith.constant 0 : index
    %0 = vector.load %arg2[%c0, %c0_0, %c0_1] : memref<1x15x32xf32, #tpu.memory_space<vmem>>, vector<1x15x32xf32>
    %1 = vector.shape_cast %0 : vector<1x15x32xf32> to vector<15x32xf32>
    %c0_2 = arith.constant 0 : index
    %c0_3 = arith.constant 0 : index
    %2 = vector.load %arg3[%c0_2, %c0_3] : memref<32x256xf32, #tpu.memory_space<vmem>>, vector<32x256xf32>
    %cst = arith.constant dense<0.000000e+00> : vector<15x256xf32>
    %3 = tpu.matmul %1, %2, %cst {dimension_numbers = #tpu.dot_dimension_numbers<[1], [0], [0], [1], [0, 0, 1, 1], [], []>} : vector<15x32xf32>, vector<32x256xf32>, vector<15x256xf32> -> vector<15x256xf32>
    %c0_4 = arith.constant 0 : index
    %c0_5 = arith.constant 0 : index
    %4 = vector.load %arg4[%c0_4, %c0_5] : memref<3x256xf32, #tpu.memory_space<vmem>>, vector<3x256xf32>
    %5 = vector.extract_strided_slice %3 {offsets = [12, 0], sizes = [3, 256], strides = [1, 1]} : vector<15x256xf32> to vector<3x256xf32>
    %6 = arith.addf %4, %5 : vector<3x256xf32>
    %7 = vector.extract_strided_slice %6 {offsets = [0, 0], sizes = [1, 256], strides = [1, 1]} : vector<3x256xf32> to vector<1x256xf32>
    %8 = vector.extract_strided_slice %6 {offsets = [1, 0], sizes = [1, 256], strides = [1, 1]} : vector<3x256xf32> to vector<1x256xf32>
    %9 = vector.extract_strided_slice %6 {offsets = [2, 0], sizes = [1, 256], strides = [1, 1]} : vector<3x256xf32> to vector<1x256xf32>
    %10 = vector.extract_strided_slice %3 {offsets = [0, 0], sizes = [1, 256], strides = [1, 1]} : vector<15x256xf32> to vector<1x256xf32>
    %11 = arith.mulf %10, %7 : vector<1x256xf32>
    %12 = vector.extract_strided_slice %3 {offsets = [1, 0], sizes = [1, 256], strides = [1, 1]} : vector<15x256xf32> to vector<1x256xf32>
    %13 = arith.mulf %12, %8 : vector<1x256xf32>
    %14 = arith.addf %11, %13 : vector<1x256xf32>
    %15 = vector.extract_strided_slice %3 {offsets = [2, 0], sizes = [1, 256], strides = [1, 1]} : vector<15x256xf32> to vector<1x256xf32>
    %16 = arith.mulf %15, %9 : vector<1x256xf32>
    %17 = arith.addf %14, %16 : vector<1x256xf32>
    %18 = vector.extract_strided_slice %3 {offsets = [4, 0], sizes = [1, 256], strides = [1, 1]} : vector<15x256xf32> to vector<1x256xf32>
    %19 = arith.mulf %18, %7 : vector<1x256xf32>
    %20 = vector.extract_strided_slice %3 {offsets = [5, 0], sizes = [1, 256], strides = [1, 1]} : vector<15x256xf32> to vector<1x256xf32>
    %21 = arith.mulf %20, %8 : vector<1x256xf32>
    %22 = arith.addf %19, %21 : vector<1x256xf32>
    %23 = vector.extract_strided_slice %3 {offsets = [6, 0], sizes = [1, 256], strides = [1, 1]} : vector<15x256xf32> to vector<1x256xf32>
    %24 = arith.mulf %23, %9 : vector<1x256xf32>
    %25 = arith.addf %22, %24 : vector<1x256xf32>
    %26 = vector.extract_strided_slice %3 {offsets = [8, 0], sizes = [1, 256], strides = [1, 1]} : vector<15x256xf32> to vector<1x256xf32>
    %27 = arith.mulf %26, %7 : vector<1x256xf32>
    %28 = vector.extract_strided_slice %3 {offsets = [9, 0], sizes = [1, 256], strides = [1, 1]} : vector<15x256xf32> to vector<1x256xf32>
    %29 = arith.mulf %28, %8 : vector<1x256xf32>
    %30 = arith.addf %27, %29 : vector<1x256xf32>
    %31 = vector.extract_strided_slice %3 {offsets = [10, 0], sizes = [1, 256], strides = [1, 1]} : vector<15x256xf32> to vector<1x256xf32>
    %32 = arith.mulf %31, %9 : vector<1x256xf32>
    %33 = arith.addf %30, %32 : vector<1x256xf32>
    %34 = vector.extract_strided_slice %3 {offsets = [3, 0], sizes = [1, 256], strides = [1, 1]} : vector<15x256xf32> to vector<1x256xf32>
    %35 = arith.addf %17, %34 : vector<1x256xf32>
    %36 = vector.extract_strided_slice %3 {offsets = [7, 0], sizes = [1, 256], strides = [1, 1]} : vector<15x256xf32> to vector<1x256xf32>
    %37 = arith.addf %25, %36 : vector<1x256xf32>
    %38 = vector.extract_strided_slice %3 {offsets = [11, 0], sizes = [1, 256], strides = [1, 1]} : vector<15x256xf32> to vector<1x256xf32>
    %39 = arith.addf %33, %38 : vector<1x256xf32>
    %40 = tpu.concatenate %35, %37, %39 in 0 : vector<1x256xf32>, vector<1x256xf32>, vector<1x256xf32> -> vector<3x256xf32>
    %c0_6 = arith.constant 0 : index
    %c0_7 = arith.constant 0 : index
    %41 = vector.load %arg5[%c0_6, %c0_7] : memref<3x256xf32, #tpu.memory_space<vmem>>, vector<3x256xf32>
    %42 = vector.extract_strided_slice %41 {offsets = [0, 0], sizes = [1, 256], strides = [1, 1]} : vector<3x256xf32> to vector<1x256xf32>
    %43 = vector.extract_strided_slice %41 {offsets = [1, 0], sizes = [1, 256], strides = [1, 1]} : vector<3x256xf32> to vector<1x256xf32>
    %44 = vector.extract_strided_slice %41 {offsets = [2, 0], sizes = [1, 256], strides = [1, 1]} : vector<3x256xf32> to vector<1x256xf32>
    %45 = vector.extract_strided_slice %3 {offsets = [0, 0], sizes = [1, 256], strides = [1, 1]} : vector<15x256xf32> to vector<1x256xf32>
    %46 = arith.mulf %45, %42 : vector<1x256xf32>
    %47 = vector.extract_strided_slice %3 {offsets = [1, 0], sizes = [1, 256], strides = [1, 1]} : vector<15x256xf32> to vector<1x256xf32>
    %48 = arith.mulf %47, %43 : vector<1x256xf32>
    %49 = arith.addf %46, %48 : vector<1x256xf32>
    %50 = vector.extract_strided_slice %3 {offsets = [2, 0], sizes = [1, 256], strides = [1, 1]} : vector<15x256xf32> to vector<1x256xf32>
    %51 = arith.mulf %50, %44 : vector<1x256xf32>
    %52 = arith.addf %49, %51 : vector<1x256xf32>
    %53 = vector.extract_strided_slice %3 {offsets = [4, 0], sizes = [1, 256], strides = [1, 1]} : vector<15x256xf32> to vector<1x256xf32>
    %54 = arith.mulf %53, %42 : vector<1x256xf32>
    %55 = vector.extract_strided_slice %3 {offsets = [5, 0], sizes = [1, 256], strides = [1, 1]} : vector<15x256xf32> to vector<1x256xf32>
    %56 = arith.mulf %55, %43 : vector<1x256xf32>
    %57 = arith.addf %54, %56 : vector<1x256xf32>
    %58 = vector.extract_strided_slice %3 {offsets = [6, 0], sizes = [1, 256], strides = [1, 1]} : vector<15x256xf32> to vector<1x256xf32>
    %59 = arith.mulf %58, %44 : vector<1x256xf32>
    %60 = arith.addf %57, %59 : vector<1x256xf32>
    %61 = vector.extract_strided_slice %3 {offsets = [8, 0], sizes = [1, 256], strides = [1, 1]} : vector<15x256xf32> to vector<1x256xf32>
    %62 = arith.mulf %61, %42 : vector<1x256xf32>
    %63 = vector.extract_strided_slice %3 {offsets = [9, 0], sizes = [1, 256], strides = [1, 1]} : vector<15x256xf32> to vector<1x256xf32>
    %64 = arith.mulf %63, %43 : vector<1x256xf32>
    %65 = arith.addf %62, %64 : vector<1x256xf32>
    %66 = vector.extract_strided_slice %3 {offsets = [10, 0], sizes = [1, 256], strides = [1, 1]} : vector<15x256xf32> to vector<1x256xf32>
    %67 = arith.mulf %66, %44 : vector<1x256xf32>
    %68 = arith.addf %65, %67 : vector<1x256xf32>
    %69 = arith.mulf %52, %52 : vector<1x256xf32>
    %70 = arith.mulf %60, %60 : vector<1x256xf32>
    %71 = arith.addf %69, %70 : vector<1x256xf32>
    %72 = arith.mulf %68, %68 : vector<1x256xf32>
    %73 = arith.addf %71, %72 : vector<1x256xf32>
    %cst_8 = arith.constant 9.99999996E-13 : f32
    %74 = vector.broadcast %cst_8 : f32 to vector<1x256xf32>
    %75 = arith.addf %73, %74 : vector<1x256xf32>
    %76 = math.rsqrt %75 : vector<1x256xf32>
    %77 = arith.mulf %52, %76 : vector<1x256xf32>
    %78 = arith.mulf %60, %76 : vector<1x256xf32>
    %79 = arith.mulf %68, %76 : vector<1x256xf32>
    %80 = tpu.concatenate %77, %78, %79 in 0 : vector<1x256xf32>, vector<1x256xf32>, vector<1x256xf32> -> vector<3x256xf32>
    %81 = vector.shape_cast %40 : vector<3x256xf32> to vector<1x3x256xf32>
    %c0_9 = arith.constant 0 : index
    %c0_10 = arith.constant 0 : index
    %c0_11 = arith.constant 0 : index
    %82 = vector.load %arg6[%c0_9, %c0_10, %c0_11] : memref<1x3x256xf32, #tpu.memory_space<vmem>>, vector<1x3x256xf32>
    tpu.vector_store %arg6[%c0_9, %c0_10, %c0_11], %81 {strides = array<i32>} : memref<1x3x256xf32, #tpu.memory_space<vmem>>, vector<1x3x256xf32>,
    %83 = vector.shape_cast %80 : vector<3x256xf32> to vector<1x3x256xf32>
    %c0_12 = arith.constant 0 : index
    %c0_13 = arith.constant 0 : index
    %c0_14 = arith.constant 0 : index
    %84 = vector.load %arg7[%c0_12, %c0_13, %c0_14] : memref<1x3x256xf32, #tpu.memory_space<vmem>>, vector<1x3x256xf32>
    tpu.vector_store %arg7[%c0_12, %c0_13, %c0_14], %83 {strides = array<i32>} : memref<1x3x256xf32, #tpu.memory_space<vmem>>, vector<1x3x256xf32>,
    return
  }
  func.func @transform_0(%arg0: i32, %arg1: i32) -> (i32, i32, i32) {
    %c0_i32 = arith.constant 0 : i32
    %c0_i32_0 = arith.constant 0 : i32
    %c0_i32_1 = arith.constant 0 : i32
    return %arg1, %c0_i32, %c0_i32_0 : i32, i32, i32
  }
  func.func @transform_1(%arg0: i32, %arg1: i32) -> (i32, i32) {
    %c0_i32 = arith.constant 0 : i32
    %c0_i32_0 = arith.constant 0 : i32
    return %c0_i32, %arg0 : i32, i32
  }
  func.func @transform_2(%arg0: i32, %arg1: i32) -> (i32, i32) {
    %c0_i32 = arith.constant 0 : i32
    %c0_i32_0 = arith.constant 0 : i32
    return %c0_i32, %arg0 : i32, i32
  }
  func.func @transform_3(%arg0: i32, %arg1: i32) -> (i32, i32) {
    %c0_i32 = arith.constant 0 : i32
    %c0_i32_0 = arith.constant 0 : i32
    return %c0_i32, %arg0 : i32, i32
  }
  func.func @transform_4(%arg0: i32, %arg1: i32) -> (i32, i32, i32) {
    %c0_i32 = arith.constant 0 : i32
    %c0_i32_0 = arith.constant 0 : i32
    return %arg1, %c0_i32, %arg0 : i32, i32, i32
  }
  func.func @transform_5(%arg0: i32, %arg1: i32) -> (i32, i32, i32) {
    %c0_i32 = arith.constant 0 : i32
    %c0_i32_0 = arith.constant 0 : i32
    return %arg1, %c0_i32, %arg0 : i32, i32, i32
  }
}

</mosaic_0001>

<llo_original>
// kernel: avatar_blend.1
$region0: #{avatar_blend.1}
  #allocation0 [shape = 'u32[]', space=smem, size = 0x4, offset = 0x4, fixed_abs, tag = 'smem constant byte address 0x4 - core index']
  #allocation1 [shape = 'u32[72,128]{1,0:T(1,128)}', space=vmem, size = 0x9000, scoped, tag = 'internal scratch']
  %s0 = inlined_call_operand.vmem [shape: f32[2,15,32], index: 0, kind: input, shape index: {}]
  %s1 = inlined_call_operand.vmem [shape: f32[32,768], index: 1, kind: input, shape index: {}]
  %s2 = inlined_call_operand.vmem [shape: f32[3,768], index: 2, kind: input, shape index: {}]
  %s3 = inlined_call_operand.vmem [shape: f32[3,768], index: 3, kind: input, shape index: {}]
  %s4 = inlined_call_operand.vmem [shape: f32[2,3,768], index: 4, kind: output, shape index: {0}]
  %s5 = inlined_call_operand.vmem [shape: f32[2,3,768], index: 5, kind: output, shape index: {1}]
  %6 = xla_tuple %s4, %s5
  %s7 = sld [smem:[#allocation0]]
  $region80: #{avatar_blend.1} parent=0
    _
  %s9 = ssub.s32 1, %s7
  %s10 = scalar_select 0, %s9, %s7
  $region1: #{avatar_blend.1} parent=0
    #allocation2 [shape = 'u8[65536]{0}', space=vmem, size = 0x10000, scoped, tag = 'input window, operand 1']
    loop: start=0, step=1, limit=8
    $region2: #{avatar_blend.1} parent=1 // loop_pre_header
      _
    $region3: #{avatar_blend.1} parent=1 // loop_header
      %s12 = sphi 0, %s16
      %p13 = scmp.ge.s32.totalorder %s12, 8
      %s19 = sphi 0, %s31
      %s20 = sphi 0, %s27
      %s21 = sphi 0, %s19
      %s22 = sphi 0, %s20
      %s23 = sphi 0, %s21
      %s24 = sphi 0, %s22
      %s34 = sphi 0, %s36
      %s37 = sphi 0, %s34
      %s38 = sphi 0, %s37
      %s54 = sphi 0, %s38
      %s60 = sphi 0, %s62
      %s63 = sphi 0, %s60
      %s64 = sphi 0, %s63
      %s80 = sphi 0, %s64
      %s86 = sphi 0, %s88
      %s89 = sphi 0, %s86
      %s90 = sphi 0, %s89
      %s106 = sphi 0, %s90
      %s112 = sphi 0, %s114
      %s115 = sphi 0, %s112
      %s116 = sphi 0, %s115
      %s132 = sphi 0, %s116
      %s140 = sphi 0, %s142
      %s143 = sphi 0, %s140
      %s144 = sphi 0, %s143
      %s160 = sphi 0, %s144
      %s168 = sphi 0, %s170
      %s171 = sphi 0, %s168
      %s172 = sphi 0, %s171
      %s188 = sphi 0, %s172
    $region4: #{avatar_blend.1} parent=1 // loop_header_branch
      %15 = sbr.rel (%p13) target = $region8
    $region5: #{avatar_blend.1} parent=1 // loop_body
      %s17 = ssub.s32 %s12, 1
      %s18 = ssub.s32 %s12, 2
      %s25 = sadd.s32 1, %s20
      %p26 = scmp.ge.s32.totalorder %s25, 2
      %s27 = scalar_select %p26, 0, %s25
      %s28 = sadd.s32 1, %s19
      %s29 = scalar_select %p26, %s28, %s19
      %p30 = scmp.ge.s32.totalorder %s29, 3
      %s31 = scalar_select %p30, 0, %s29
      %s32 = ssub.s32 %s20, %s27
      %p33 = scmp.eq.s32.totalorder %s32, 0
      %s35 = sadd.s32 %s34, 1
      %s36 = scalar_select %p33, %s34, %s35
      %p39 = pneg %p33
      %p40 = scmp.eq.s32.totalorder %s12, 5
      %p41 = por %p39, %p40
      %p42 = scmp.ne.s32.totalorder %s34, %s37
      %p43 = scmp.eq.s32.totalorder %s12, 0
      %p44 = por %p42, %p43
      %p45 = scmp.ne.s32.totalorder %s34, %s37
      %p46 = scmp.eq.s32.totalorder %s17, 5
      %p47 = por %p45, %p46
      %p48 = scmp.ne.s32.totalorder %s37, %s38
      %p49 = scmp.eq.s32.totalorder %s17, 0
      %p50 = por %p48, %p49
      %p51 = scmp.ne.s32.totalorder %s37, %s38
      %p52 = scmp.eq.s32.totalorder %s18, 5
      %p53 = por %p51, %p52
      %p55 = scmp.ne.s32.totalorder %s38, %s54
      %p56 = scmp.eq.s32.totalorder %s18, 0
      %p57 = por %p55, %p56
      %s58 = ssub.s32 %s19, %s31
      %p59 = scmp.eq.s32.totalorder %s58, 0
      %s61 = sadd.s32 %s60, 1
      %s62 = scalar_select %p59, %s60, %s61
      %p65 = pneg %p59
      %p66 = scmp.eq.s32.totalorder %s12, 5
      %p67 = por %p65, %p66
      %p68 = scmp.ne.s32.totalorder %s60, %s63
      %p69 = scmp.eq.s32.totalorder %s12, 0
      %p70 = por %p68, %p69
      %p71 = scmp.ne.s32.totalorder %s60, %s63
      %p72 = scmp.eq.s32.totalorder %s17, 5
      %p73 = por %p71, %p72
      %p74 = scmp.ne.s32.totalorder %s63, %s64
      %p75 = scmp.eq.s32.totalorder %s17, 0
      %p76 = por %p74, %p75
      %p77 = scmp.ne.s32.totalorder %s63, %s64
      %p78 = scmp.eq.s32.totalorder %s18, 5
      %p79 = por %p77, %p78
      %p81 = scmp.ne.s32.totalorder %s64, %s80
      %p82 = scmp.eq.s32.totalorder %s18, 0
      %p83 = por %p81, %p82
      %s84 = ssub.s32 %s19, %s31
      %p85 = scmp.eq.s32.totalorder %s84, 0
      %s87 = sadd.s32 %s86, 1
      %s88 = scalar_select %p85, %s86, %s87
      %p91 = pneg %p85
      %p92 = scmp.eq.s32.totalorder %s12, 5
      %p93 = por %p91, %p92
      %p94 = scmp.ne.s32.totalorder %s86, %s89
      %p95 = scmp.eq.s32.totalorder %s12, 0
      %p96 = por %p94, %p95
      %p97 = scmp.ne.s32.totalorder %s86, %s89
      %p98 = scmp.eq.s32.totalorder %s17, 5
      %p99 = por %p97, %p98
      %p100 = scmp.ne.s32.totalorder %s89, %s90
      %p101 = scmp.eq.s32.totalorder %s17, 0
      %p102 = por %p100, %p101
      %p103 = scmp.ne.s32.totalorder %s89, %s90
      %p104 = scmp.eq.s32.totalorder %s18, 5
      %p105 = por %p103, %p104
      %p107 = scmp.ne.s32.totalorder %s90, %s106
      %p108 = scmp.eq.s32.totalorder %s18, 0
      %p109 = por %p107, %p108
      %s110 = ssub.s32 %s19, %s31
      %p111 = scmp.eq.s32.totalorder %s110, 0
      %s113 = sadd.s32 %s112, 1
      %s114 = scalar_select %p111, %s112, %s113
      %p117 = pneg %p111
      %p118 = scmp.eq.s32.totalorder %s12, 5
      %p119 = por %p117, %p118
      %p120 = scmp.ne.s32.totalorder %s112, %s115
      %p121 = scmp.eq.s32.totalorder %s12, 0
      %p122 = por %p120, %p121
      %p123 = scmp.ne.s32.totalorder %s112, %s115
      %p124 = scmp.eq.s32.totalorder %s17, 5
      %p125 = por %p123, %p124
      %p126 = scmp.ne.s32.totalorder %s115, %s116
      %p127 = scmp.eq.s32.totalorder %s17, 0
      %p128 = por %p126, %p127
      %p129 = scmp.ne.s32.totalorder %s115, %s116
      %p130 = scmp.eq.s32.totalorder %s18, 5
      %p131 = por %p129, %p130
      %p133 = scmp.ne.s32.totalorder %s116, %s132
      %p134 = scmp.eq.s32.totalorder %s18, 0
      %p135 = por %p133, %p134
      %s136 = ssub.s32 %s20, %s27
      %s137 = ssub.s32 %s19, %s31
      %s138 = sor.u32 %s136, %s137
      %p139 = scmp.eq.s32.totalorder %s138, 0
      %s141 = sadd.s32 %s140, 1
      %s142 = scalar_select %p139, %s140, %s141
      %p145 = pneg %p139
      %p146 = scmp.eq.s32.totalorder %s12, 5
      %p147 = por %p145, %p146
      %p148 = scmp.ne.s32.totalorder %s140, %s143
      %p149 = scmp.eq.s32.totalorder %s12, 0
      %p150 = por %p148, %p149
      %p151 = scmp.ne.s32.totalorder %s140, %s143
      %p152 = scmp.eq.s32.totalorder %s17, 5
      %p153 = por %p151, %p152
      %p154 = scmp.ne.s32.totalorder %s143, %s144
      %p155 = scmp.eq.s32.totalorder %s17, 0
      %p156 = por %p154, %p155
      %p157 = scmp.ne.s32.totalorder %s143, %s144
      %p158 = scmp.eq.s32.totalorder %s18, 5
      %p159 = por %p157, %p158
      %p161 = scmp.ne.s32.totalorder %s144, %s160
      %p162 = scmp.eq.s32.totalorder %s18, 0
      %p163 = por %p161, %p162
      %s164 = ssub.s32 %s20, %s27
      %s165 = ssub.s32 %s19, %s31
      %s166 = sor.u32 %s164, %s165
      %p167 = scmp.eq.s32.totalorder %s166, 0
      %s169 = sadd.s32 %s168, 1
      %s170 = scalar_select %p167, %s168, %s169
      %p173 = pneg %p167
      %p174 = scmp.eq.s32.totalorder %s12, 5
      %p175 = por %p173, %p174
      %p176 = scmp.ne.s32.totalorder %s168, %s171
      %p177 = scmp.eq.s32.totalorder %s12, 0
      %p178 = por %p176, %p177
      %p179 = scmp.ne.s32.totalorder %s168, %s171
      %p180 = scmp.eq.s32.totalorder %s17, 5
      %p181 = por %p179, %p180
      %p182 = scmp.ne.s32.totalorder %s171, %s172
      %p183 = scmp.eq.s32.totalorder %s17, 0
      %p184 = por %p182, %p183
      %p185 = scmp.ne.s32.totalorder %s171, %s172
      %p186 = scmp.eq.s32.totalorder %s18, 5
      %p187 = por %p185, %p186
      %p189 = scmp.ne.s32.totalorder %s172, %s188
      %p190 = scmp.eq.s32.totalorder %s18, 0
      %p191 = por %p189, %p190
      %p192 = scmp.le.s32.totalorder 1, %s12
      %p193 = scmp.lt.s32.totalorder %s12, 7
      %p194 = pnand %p192, %p193
      %p195 = pneg %p194
      // Predicated region
      $region9: #{avatar_blend.1} parent=5 // pred_check
        _
      $region10: #{avatar_blend.1} parent=5 // pred_check_branch
        %197 = sbr.rel (%p194) target = $region12
      $region11: #{avatar_blend.1} parent=5 // pred_region
        %s198 = ssub.s32 %s12, 1
      $region12: #{avatar_blend.1} parent=5 // pred_fallthru
        _
      %p199 = scmp.lt.s32.totalorder %s12, 6
      // Predicated region
      $region13: #{avatar_blend.1} parent=5 // pred_check
        %p200 = pneg %p199
      $region14: #{avatar_blend.1} parent=5 // pred_check_branch
        %202 = sbr.rel (%p200) target = $region16
      $region15: #{avatar_blend.1} parent=5 // pred_region
        // Predicated region
        $region17: #{avatar_blend.1} parent=15 // pred_check
          %p203 = pneg %p44
        $region18: #{avatar_blend.1} parent=15 // pred_check_branch
          %205 = sbr.rel (%p203) target = $region20
        $region19: #{avatar_blend.1} parent=15 // pred_region
          %p206 = scmp.lt.s32.totalorder %s20, 1
          %s207 = scalar_select %p206, %s20, 1
          %s208 = smul.addr %s207, 2
          %s209 = smul.addr %s208, 8
          %s210 = scalar_lea.vmem %s0, %s209
        $region20: #{avatar_blend.1} parent=15 // pred_fallthru
          _
        // Predicated region
        $region21: #{avatar_blend.1} parent=15 // pred_check
          %p211 = pneg %p70
        $region22: #{avatar_blend.1} parent=15 // pred_check_branch
          %213 = sbr.rel (%p211) target = $region24
        $region23: #{avatar_blend.1} parent=15 // pred_region
          %s214 = sand.u32 %s60, 1
          %s215 = sand.u32 %s60, 1
          %s216 = smul.addr %s215, 64
          %s217 = scalar_lea.vmem [#allocation2], %s216
          %s218 = smul.u32 2, %s19
          %s219 = smul.addr %s218, 8
          %s220 = scalar_lea.vmem %s1, %s219
          // Predicated region
          $region25: #{avatar_blend.1} parent=23 // pred_check
            _
          $region26: #{avatar_blend.1} parent=23 // pred_check_branch
            %222 = sbr.rel (0) target = $region28
          $region27: #{avatar_blend.1} parent=23 // pred_region
            // Predicated region
            $region29: #{avatar_blend.1} parent=27 // pred_check
              _
            $region30: #{avatar_blend.1} parent=27 // pred_check_branch
              %224 = sbr.rel (0) target = $region32
            $region31: #{avatar_blend.1} parent=27 // pred_region
              loop: start=0, step=1, limit=1
              $region33: #{avatar_blend.1} parent=31 // loop_pre_header
                _
              $region34: #{avatar_blend.1} parent=31 // loop_header
                %s226 = sphi 0, %s230
                %p227 = scmp.ge.s32.totalorder %s226, 1
                %s231 = sphi %s220, %s220
                %s232 = sphi %s217, %s217
              $region35: #{avatar_blend.1} parent=31 // loop_header_branch
                %229 = sbr.rel (%p227) target = $region39
              $region36: #{avatar_blend.1} parent=31 // loop_body
                %v233 = vld [vmem:[%s231] sm:$0xff]
                %234 = vst [vmem:[%s232] sm:$0xff] %v233
                %v235 = vld [vmem:[%s231 + $0x8] sm:$0xff]
                %236 = vst [vmem:[%s232 + $0x8] sm:$0xff] %v235
                %v237 = vld [vmem:[%s231 + $0x30] sm:$0xff]
                %238 = vst [vmem:[%s232 + $0x10] sm:$0xff] %v237
                %v239 = vld [vmem:[%s231 + $0x38] sm:$0xff]
                %240 = vst [vmem:[%s232 + $0x18] sm:$0xff] %v239
                %v241 = vld [vmem:[%s231 + $0x60] sm:$0xff]
                %242 = vst [vmem:[%s232 + $0x20] sm:$0xff] %v241
                %v243 = vld [vmem:[%s231 + $0x68] sm:$0xff]
                %244 = vst [vmem:[%s232 + $0x28] sm:$0xff] %v243
                %v245 = vld [vmem:[%s231 + $0x90] sm:$0xff]
                %246 = vst [vmem:[%s232 + $0x30] sm:$0xff] %v245
                %v247 = vld [vmem:[%s231 + $0x98] sm:$0xff]
                %248 = vst [vmem:[%s232 + $0x38] sm:$0xff] %v247
              $region37: #{avatar_blend.1} parent=31 // loop_footer
                %s230 = sadd.s32 1, %s226
              $region38: #{avatar_blend.1} parent=31 // loop_footer_branch
                %225 = sbr.rel target = $region34
              $region39: #{avatar_blend.1} parent=31 // loop_exit
                _
            $region32: #{avatar_blend.1} parent=27 // pred_fallthru
              _
            // Predicated region
            $region40: #{avatar_blend.1} parent=27 // pred_check
              _
            $region41: #{avatar_blend.1} parent=27 // pred_check_branch
              %250 = sbr.rel target = $region43
            $region42: #{avatar_blend.1} parent=27 // pred_region
              _
            $region43: #{avatar_blend.1} parent=27 // pred_fallthru
              _
          $region28: #{avatar_blend.1} parent=23 // pred_fallthru
            _
          %251 = vnop
        $region24: #{avatar_blend.1} parent=15 // pred_fallthru
          _
        // Predicated region
        $region44: #{avatar_blend.1} parent=15 // pred_check
          %p252 = pneg %p96
        $region45: #{avatar_blend.1} parent=15 // pred_check_branch
          %254 = sbr.rel (%p252) target = $region47
        $region46: #{avatar_blend.1} parent=15 // pred_region
          %s255 = smul.u32 2, %s19
          %p256 = scmp.lt.s32.totalorder %s255, 5
          %s257 = scalar_select %p256, %s255, 5
          %s258 = smul.addr %s257, 4
          %s259 = scalar_lea.vmem %s2, %s258
          %s260 = smul.u32 2, %s19
        $region47: #{avatar_blend.1} parent=15 // pred_fallthru
          _
        // Predicated region
        $region48: #{avatar_blend.1} parent=15 // pred_check
          %p261 = pneg %p122
        $region49: #{avatar_blend.1} parent=15 // pred_check_branch
          %263 = sbr.rel (%p261) target = $region51
        $region50: #{avatar_blend.1} parent=15 // pred_region
          %s264 = smul.u32 2, %s19
          %p265 = scmp.lt.s32.totalorder %s264, 5
          %s266 = scalar_select %p265, %s264, 5
          %s267 = smul.addr %s266, 4
          %s268 = scalar_lea.vmem %s3, %s267
          %s269 = smul.u32 2, %s19
        $region51: #{avatar_blend.1} parent=15 // pred_fallthru
          _
      $region16: #{avatar_blend.1} parent=5 // pred_fallthru
        _
      %p270 = scmp.le.s32.totalorder 1, %s12
      %p271 = scmp.lt.s32.totalorder %s12, 7
      %p272 = pnand %p270, %p271
      %p273 = pneg %p272
      // Predicated region
      $region52: #{avatar_blend.1} parent=5 // pred_check
        _
      $region53: #{avatar_blend.1} parent=5 // pred_check_branch
        %275 = sbr.rel (%p272) target = $region55
      $region54: #{avatar_blend.1} parent=5 // pred_region
        %s276 = ssub.s32 %s12, 1
        %s277 = sand.u32 %s63, 1
        %s278 = sand.u32 %s63, 1
        %s279 = smul.addr %s278, 64
        %s280 = scalar_lea.vmem [#allocation2], %s279
        // Predicated region
        $region56: #{avatar_blend.1} parent=54 // pred_check
          %p281 = pneg %p76
        $region57: #{avatar_blend.1} parent=54 // pred_check_branch
          %283 = sbr.rel (%p281) target = $region59
        $region58: #{avatar_blend.1} parent=54 // pred_region
          _
        $region59: #{avatar_blend.1} parent=54 // pred_fallthru
          _
        %p284 = scmp.lt.s32.totalorder %s22, 1
        %s285 = scalar_select %p284, %s22, 1
        %s286 = smul.addr %s285, 2
        %s287 = smul.addr %s286, 8
        %s288 = scalar_lea.vmem %s0, %s287
        %p289 = pneg %p50
        %p290 = pneg %p47
        %s291 = sand.u32 %s63, 1
        %s292 = sand.u32 %s63, 1
        %s293 = smul.addr %s292, 64
        %s294 = scalar_lea.vmem [#allocation2], %s293
        %p295 = pneg %p76
        %p296 = pneg %p73
        %s297 = smul.u32 2, %s21
        %p298 = scmp.lt.s32.totalorder %s297, 5
        %s299 = scalar_select %p298, %s297, 5
        %s300 = smul.addr %s299, 4
        %s301 = scalar_lea.vmem %s2, %s300
        %p302 = pneg %p102
        %p303 = pneg %p99
        %s304 = smul.u32 2, %s21
        %p305 = scmp.lt.s32.totalorder %s304, 5
        %s306 = scalar_select %p305, %s304, 5
        %s307 = smul.addr %s306, 4
        %s308 = scalar_lea.vmem %s3, %s307
        %p309 = pneg %p128
        %p310 = pneg %p125
        %p311 = pneg %p156
        %p312 = pneg %p153
        %s313 = smul.u32 2, %s21
        %p314 = scmp.lt.s32.totalorder %s22, 1
        %s315 = scalar_select %p314, %s22, 1
        %p316 = scmp.lt.s32.totalorder %s313, 5
        %s317 = scalar_select %p316, %s313, 5
        %s318 = smul.addr %s315, 6
        %s319 = sadd.s32 %s317, %s318
        %s320 = smul.addr %s319, 4
        %s321 = scalar_lea.vmem %s4, %s320
        %p322 = pneg %p184
        %p323 = pneg %p181
        %s324 = smul.u32 2, %s21
        %p325 = scmp.lt.s32.totalorder %s22, 1
        %s326 = scalar_select %p325, %s22, 1
        %p327 = scmp.lt.s32.totalorder %s324, 5
        %s328 = scalar_select %p327, %s324, 5
        %s329 = smul.addr %s326, 6
        %s330 = sadd.s32 %s328, %s329
        %s331 = smul.addr %s330, 4
        %s332 = scalar_lea.vmem %s5, %s331
        %p333 = scmp.lt.s32.totalorder %s22, 1
        %s334 = scalar_select %p333, %s22, 1
        %s335 = smul.addr %s334, 2
        %s336 = smul.addr %s335, 8
        %s337 = scalar_lea.vmem %s0, %s336
        %s338 = smul.u32 2, %s21
        %s339 = smul.u32 2, %s21
        %p340 = scmp.lt.s32.totalorder %s339, 5
        %s341 = scalar_select %p340, %s339, 5
        %s342 = smul.addr %s341, 4
        %s343 = scalar_lea.vmem %s2, %s342
        %s344 = smul.u32 2, %s21
        %s345 = smul.u32 2, %s21
        %p346 = scmp.lt.s32.totalorder %s345, 5
        %s347 = scalar_select %p346, %s345, 5
        %s348 = smul.addr %s347, 4
        %s349 = scalar_lea.vmem %s3, %s348
        %s350 = smul.u32 2, %s21
        %s351 = smul.u32 2, %s21
        %p352 = scmp.lt.s32.totalorder %s22, 1
        %s353 = scalar_select %p352, %s22, 1
        %p354 = scmp.lt.s32.totalorder %s351, 5
        %s355 = scalar_select %p354, %s351, 5
        %s356 = smul.addr %s353, 6
        %s357 = sadd.s32 %s355, %s356
        %s358 = smul.addr %s357, 4
        %s359 = scalar_lea.vmem %s4, %s358
        %s360 = smul.u32 2, %s21
        %s361 = smul.u32 2, %s21
        %p362 = scmp.lt.s32.totalorder %s22, 1
        %s363 = scalar_select %p362, %s22, 1
        %p364 = scmp.lt.s32.totalorder %s361, 5
        %s365 = scalar_select %p364, %s361, 5
        %s366 = smul.addr %s363, 6
        %s367 = sadd.s32 %s365, %s366
        %s368 = smul.addr %s367, 4
        %s369 = scalar_lea.vmem %s5, %s368
        %s370 = smul.u32 2, %s21
        %v371 = vld [vmem:[%s337] sm:$0xff]
        %v372 = vld [vmem:[%s337 + $0x8] sm:$0x7f]
        %v373 = vld [vmem:[%s280] sm:$0xff]
        %v374 = vld [vmem:[%s280 + $0x8] sm:$0xff]
        %v375 = vld [vmem:[%s280 + $0x10] sm:$0xff]
        %v376 = vld [vmem:[%s280 + $0x18] sm:$0xff]
        %v377 = vld [vmem:[%s280 + $0x20] sm:$0xff]
        %v378 = vld [vmem:[%s280 + $0x28] sm:$0xff]
        %v379 = vld [vmem:[%s280 + $0x30] sm:$0xff]
        %v380 = vld [vmem:[%s280 + $0x38] sm:$0xff]
        %vm381 = vcmask 261120
        %v383 = vsel %vm381, %v371, 0
        %v386 = vsel %vm381, %v372, 0
        %388 = vmatpush.msra.mxu0 0.0
        %389 = vmatpush.msra.mxu0 0.0
        %390 = vmatpush.msra.mxu0 0.0
        %391 = vmatpush.msra.mxu0 0.0
        %392 = vmatpush.msra.mxu0 0.0
        %393 = vmatpush.msra.mxu0 0.0
        %394 = vmatpush.msra.mxu0 0.0
        %395 = vmatpush.msra.mxu0 0.0
        %396 = vmatpush.msra.mxu0 0.0
        %397 = vmatpush.msra.mxu0 0.0
        %398 = vmatpush.msra.mxu0 0.0
        %399 = vmatpush.msra.mxu0 0.0
        %400 = vmatpush.msra.mxu0 %v379
        %401 = vmatpush.msra.mxu0 %v377
        %402 = vmatpush.msra.mxu0 %v375
        %403 = vmatpush.msra.mxu0 %v373
        %404 = vmatmul.f32.gmra.mxu0 %v383
        %v405 = vpop.f32.mrf.mxu0
        %v406 = vadd.f32 0.0, %v405
        %407 = vmatmul.f32.gmra.mxu0 %v386
        %v408 = vpop.f32.mrf.mxu0
        %v409 = vadd.f32 0.0, %v408
        %410 = vdwg.mxu0
        %411 = vmatpush.msra.mxu0 0.0
        %412 = vmatpush.msra.mxu0 0.0
        %413 = vmatpush.msra.mxu0 0.0
        %414 = vmatpush.msra.mxu0 0.0
        %415 = vmatpush.msra.mxu0 0.0
        %416 = vmatpush.msra.mxu0 0.0
        %417 = vmatpush.msra.mxu0 0.0
        %418 = vmatpush.msra.mxu0 0.0
        %419 = vmatpush.msra.mxu0 0.0
        %420 = vmatpush.msra.mxu0 0.0
        %421 = vmatpush.msra.mxu0 0.0
        %422 = vmatpush.msra.mxu0 0.0
        %423 = vmatpush.msra.mxu0 %v380
        %424 = vmatpush.msra.mxu0 %v378
        %425 = vmatpush.msra.mxu0 %v376
        %426 = vmatpush.msra.mxu0 %v374
        %427 = vmatmul.f32.gmra.mxu0 %v383
        %v428 = vpop.f32.mrf.mxu0
        %v429 = vadd.f32 0.0, %v428
        %430 = vmatmul.f32.gmra.mxu0 %v386
        %v431 = vpop.f32.mrf.mxu0
        %v432 = vadd.f32 0.0, %v431
        %433 = vdwg.mxu0
        %v434 = vld [vmem:[%s343] sm:$0x77]
        %437 = vst.sshfl [vmem:[#allocation1] sm:$0xff pattern:$0x75316420] %v409
        %438 = vst.sshfl [vmem:[#allocation1 + $0x8] sm:$0xff pattern:$0x75316420] %v432
        %s439 = scalar_lea.vmem [#allocation1], 1
        %v440 = vld [vmem:[%s439] ss:$2 sm:$0xff]
        %v442 = vadd.f32 %v434, %v440
        %v444 = vperm.slane %v442, 0
        %v445 = vperm.slane %v442, 4
        %v448 = vmul.f32 %v406, %v444
        %v449 = vmul.f32 %v429, %v445
        %v450 = vperm.slane %v442, 1
        %v451 = vperm.slane %v442, 5
        %v454 = vmul.f32 %v406, %v450
        %v455 = vmul.f32 %v429, %v451
        %v458 = vrot.slane %v454, 1
        %v459 = vrot.slane %v455, 1
        %v462 = vadd.f32 %v448, %v458
        %v463 = vadd.f32 %v449, %v459
        %v464 = vperm.slane %v442, 2
        %v465 = vperm.slane %v442, 6
        %v468 = vmul.f32 %v406, %v464
        %v469 = vmul.f32 %v429, %v465
        %v472 = vrot.slane %v468, 2
        %v473 = vrot.slane %v469, 2
        %v476 = vadd.f32 %v462, %v472
        %v477 = vadd.f32 %v463, %v473
        %v478 = vmul.f32 %v409, %v444
        %v479 = vmul.f32 %v432, %v445
        %v480 = vmul.f32 %v409, %v450
        %v481 = vmul.f32 %v432, %v451
        %v484 = vrot.slane %v480, 1
        %v485 = vrot.slane %v481, 1
        %v488 = vadd.f32 %v478, %v484
        %v489 = vadd.f32 %v479, %v485
        %v490 = vmul.f32 %v409, %v464
        %v491 = vmul.f32 %v432, %v465
        %v494 = vrot.slane %v490, 2
        %v495 = vrot.slane %v491, 2
        %v498 = vadd.f32 %v488, %v494
        %v499 = vadd.f32 %v489, %v495
        %v502 = vrot.slane %v406, 3
        %v503 = vrot.slane %v429, 3
        %v506 = vadd.f32 %v476, %v502
        %v507 = vadd.f32 %v477, %v503
        %v508 = vrot.slane %v409, 3
        %v509 = vrot.slane %v432, 3
        %v512 = vadd.f32 %v498, %v508
        %v513 = vadd.f32 %v499, %v509
        %v516 = vrot.slane %v506, 3
        %v517 = vrot.slane %v507, 3
        %v522 = vrot.slane %v512, 6
        %v523 = vrot.slane %v513, 6
        %vm526 = vcmask 1040384
        %v527 = vsel %vm526, %v506, %v516
        %v528 = vsel %vm526, %v507, %v517
        %vm529 = vcmask 1041408
        %v530 = vsel %vm529, %v527, %v522
        %v531 = vsel %vm529, %v528, %v523
        %v532 = vld [vmem:[%s349] sm:$0x77]
        %v534 = vperm.slane %v532, 0
        %v535 = vperm.slane %v532, 4
        %v538 = vmul.f32 %v406, %v534
        %v539 = vmul.f32 %v429, %v535
        %v540 = vperm.slane %v532, 1
        %v541 = vperm.slane %v532, 5
        %v544 = vmul.f32 %v406, %v540
        %v545 = vmul.f32 %v429, %v541
        %v548 = vrot.slane %v544, 1
        %v549 = vrot.slane %v545, 1
        %v552 = vadd.f32 %v538, %v548
        %v553 = vadd.f32 %v539, %v549
        %v554 = vperm.slane %v532, 2
        %v555 = vperm.slane %v532, 6
        %v558 = vmul.f32 %v406, %v554
        %v559 = vmul.f32 %v429, %v555
        %v562 = vrot.slane %v558, 2
        %v563 = vrot.slane %v559, 2
        %v566 = vadd.f32 %v552, %v562
        %v567 = vadd.f32 %v553, %v563
        %v568 = vmul.f32 %v409, %v534
        %v569 = vmul.f32 %v432, %v535
        %v570 = vmul.f32 %v409, %v540
        %v571 = vmul.f32 %v432, %v541
        %v574 = vrot.slane %v570, 1
        %v575 = vrot.slane %v571, 1
        %v578 = vadd.f32 %v568, %v574
        %v579 = vadd.f32 %v569, %v575
        %v580 = vmul.f32 %v409, %v554
        %v581 = vmul.f32 %v432, %v555
        %v584 = vrot.slane %v580, 2
        %v585 = vrot.slane %v581, 2
        %v588 = vadd.f32 %v578, %v584
        %v589 = vadd.f32 %v579, %v585
        %v590 = vmul.f32 %v566, %v566
        %v591 = vmul.f32 %v567, %v567
        %v594 = vrot.slane %v590, 4
        %v595 = vrot.slane %v591, 4
        %v598 = vadd.f32 %v590, %v594
        %v599 = vadd.f32 %v591, %v595
        %v600 = vmul.f32 %v588, %v588
        %v601 = vmul.f32 %v589, %v589
        %v602 = vadd.f32 %v598, %v600
        %v603 = vadd.f32 %v599, %v601
        %v604 = vadd.f32 %v602, 1e-12
        %v605 = vadd.f32 %v603, 1e-12
        %v606 = vrsqrt.pop %v604
        %v607 = vmul.f32 %v606, %v604
        %v608 = vmul.f32 %v607, %v606
        %v609 = vmul.f32 0.5, %v608
        %v610 = vsub.f32 1.5, %v609
        %v611 = vmul.f32 %v606, %v610
        %vm612 = vweird.f32 %v604
        %vm613 = vweird.f32 %v606
        %vm614 = vmor %vm612, %vm613
        %v615 = vsel %vm614, %v606, %v611
        %v616 = vrsqrt.pop %v605
        %v617 = vmul.f32 %v616, %v605
        %v618 = vmul.f32 %v617, %v616
        %v619 = vmul.f32 0.5, %v618
        %v620 = vsub.f32 1.5, %v619
        %v621 = vmul.f32 %v616, %v620
        %vm622 = vweird.f32 %v605
        %vm623 = vweird.f32 %v616
        %vm624 = vmor %vm622, %vm623
        %v625 = vsel %vm624, %v616, %v621
        %v626 = vmul.f32 %v566, %v615
        %v627 = vmul.f32 %v567, %v625
        %v630 = vrot.slane %v615, 4
        %v631 = vrot.slane %v625, 4
        %v634 = vmul.f32 %v566, %v630
        %v635 = vmul.f32 %v567, %v631
        %v636 = vmul.f32 %v588, %v615
        %v637 = vmul.f32 %v589, %v625
        %v640 = vrot.slane %v634, 3
        %v641 = vrot.slane %v635, 3
        %v646 = vrot.slane %v636, 6
        %v647 = vrot.slane %v637, 6
        %v650 = vsel %vm526, %v626, %v640
        %v651 = vsel %vm526, %v627, %v641
        %v652 = vsel %vm529, %v650, %v646
        %v653 = vsel %vm529, %v651, %v647
        %v656 = vrot.slane %v531, 4
        %vm657 = vcmask 1043456
        %v658 = vsel %vm657, %v530, %v656
        %660 = vst [vmem:[%s359] sm:$0x77] %v658
        %v663 = vrot.slane %v653, 4
        %v664 = vsel %vm657, %v652, %v663
        %666 = vst [vmem:[%s369] sm:$0x77] %v664
        %s667 = smul.u32 2, %s21
        %p668 = scmp.lt.s32.totalorder %s22, 1
        %s669 = scalar_select %p668, %s22, 1
        %p670 = scmp.lt.s32.totalorder %s667, 5
        %s671 = scalar_select %p670, %s667, 5
        %s672 = smul.addr %s669, 6
        %s673 = sadd.s32 %s671, %s672
        %s674 = smul.addr %s673, 4
        %s675 = scalar_lea.vmem %s4, %s674
        %s676 = smul.u32 2, %s21
        %p677 = scmp.lt.s32.totalorder %s22, 1
        %s678 = scalar_select %p677, %s22, 1
        %p679 = scmp.lt.s32.totalorder %s676, 5
        %s680 = scalar_select %p679, %s676, 5
        %s681 = smul.addr %s678, 6
        %s682 = sadd.s32 %s680, %s681
        %s683 = smul.addr %s682, 4
        %s684 = scalar_lea.vmem %s5, %s683
        // Predicated region
        $region60: #{avatar_blend.1} parent=54 // pred_check
          %p685 = pneg %p153
        $region61: #{avatar_blend.1} parent=54 // pred_check_branch
          %687 = sbr.rel (%p685) target = $region63
        $region62: #{avatar_blend.1} parent=54 // pred_region
          %s688 = smul.u32 2, %s21
        $region63: #{avatar_blend.1} parent=54 // pred_fallthru
          _
        // Predicated region
        $region64: #{avatar_blend.1} parent=54 // pred_check
          %p689 = pneg %p181
        $region65: #{avatar_blend.1} parent=54 // pred_check_branch
          %691 = sbr.rel (%p689) target = $region67
        $region66: #{avatar_blend.1} parent=54 // pred_region
          %s692 = smul.u32 2, %s21
        $region67: #{avatar_blend.1} parent=54 // pred_fallthru
          _
      $region55: #{avatar_blend.1} parent=5 // pred_fallthru
        _
      %p693 = scmp.le.s32.totalorder 2, %s12
      // Predicated region
      $region68: #{avatar_blend.1} parent=5 // pred_check
        %p694 = pneg %p693
      $region69: #{avatar_blend.1} parent=5 // pred_check_branch
        %696 = sbr.rel (%p694) target = $region71
      $region70: #{avatar_blend.1} parent=5 // pred_region
        %s697 = ssub.s32 %s12, 2
        // Predicated region
        $region72: #{avatar_blend.1} parent=70 // pred_check
          %p698 = pneg %p159
        $region73: #{avatar_blend.1} parent=70 // pred_check_branch
          %700 = sbr.rel (%p698) target = $region75
        $region74: #{avatar_blend.1} parent=70 // pred_region
          %s701 = smul.u32 2, %s23
          %p702 = scmp.lt.s32.totalorder %s24, 1
          %s703 = scalar_select %p702, %s24, 1
          %p704 = scmp.lt.s32.totalorder %s701, 5
          %s705 = scalar_select %p704, %s701, 5
          %s706 = smul.addr %s703, 6
          %s707 = sadd.s32 %s705, %s706
          %s708 = smul.addr %s707, 4
          %s709 = scalar_lea.vmem %s4, %s708
        $region75: #{avatar_blend.1} parent=70 // pred_fallthru
          _
        // Predicated region
        $region76: #{avatar_blend.1} parent=70 // pred_check
          %p710 = pneg %p187
        $region77: #{avatar_blend.1} parent=70 // pred_check_branch
          %712 = sbr.rel (%p710) target = $region79
        $region78: #{avatar_blend.1} parent=70 // pred_region
          %s713 = smul.u32 2, %s23
          %p714 = scmp.lt.s32.totalorder %s24, 1
          %s715 = scalar_select %p714, %s24, 1
          %p716 = scmp.lt.s32.totalorder %s713, 5
          %s717 = scalar_select %p716, %s713, 5
          %s718 = smul.addr %s715, 6
          %s719 = sadd.s32 %s717, %s718
          %s720 = smul.addr %s719, 4
          %s721 = scalar_lea.vmem %s5, %s720
        $region79: #{avatar_blend.1} parent=70 // pred_fallthru
          _
      $region71: #{avatar_blend.1} parent=5 // pred_fallthru
        _
    $region6: #{avatar_blend.1} parent=1 // loop_footer
      %s16 = sadd.s32 1, %s12
    $region7: #{avatar_blend.1} parent=1 // loop_footer_branch
      %11 = sbr.rel target = $region3
    $region8: #{avatar_blend.1} parent=1 // loop_exit
      _

</llo_original>
